<compile_context>
chip_gen: v7x
topology: tpu7x:2x2x1
jax: 0.10.0
libtpu: 0.0.40
codegen_flags: <defaults>
</compile_context>

<pallas_src>
import functools

import jax
import jax.numpy as jnp
from jax.experimental import pallas as pl
from jax.experimental.pallas import tpu as pltpu


def _identity_kernel(x_ref, o_ref):
    # Straight VMEM tile copy — the entire device compute of the kernel path.
    o_ref[...] = x_ref[...]


def _pick_tile_rows(rows, sub, cap_rows):
    """Largest tile_rows <= cap_rows, multiple of `sub`; prefer exact divisors
    of `rows` so the grid has no ragged (masked-store) last block."""
    cap = min(rows, cap_rows)
    cap = max(sub, (cap // sub) * sub)
    # Bounded downward search for an exact divisor (trace-time only, cached).
    cand = cap
    for _ in range(1024):
        if cand < sub:
            break
        if rows % cand == 0:
            return cand
        cand -= sub
    return cap  # no nearby divisor: accept the ragged last block


@functools.lru_cache(maxsize=None)
def _build_identity_copy(shape, dtype_name):
    """Build (once per shape/dtype) a jitted, input-donating Pallas identity copy."""
    dtype = jnp.dtype(dtype_name)
    lane = 128
    itemsize = dtype.itemsize
    # Dtype-aware sublane packing: f32 -> 8, bf16/f16 -> 16, int8/fp8 -> 32.
    sub = max(8, 32 // itemsize)

    n = 1
    for d in shape:
        n *= d

    if n == 0 or n % lane != 0 or (n // lane) % sub != 0:
        return None  # caller returns x directly (zero device work)

    rows = n // lane

    # ~8 MiB blocks (v7x-friendly); 2 in + 2 out double buffers = 32 MiB.
    block_bytes_target = 8 * 1024 * 1024
    cap_rows = block_bytes_target // (lane * itemsize)
    tile_rows = _pick_tile_rows(rows, sub, cap_rows)

    grid = (pl.cdiv(rows, tile_rows),)

    copy_call = pl.pallas_call(
        _identity_kernel,
        out_shape=jax.ShapeDtypeStruct((rows, lane), dtype),
        grid_spec=pltpu.PrefetchScalarGridSpec(
            num_scalar_prefetch=0,
            grid=grid,
            in_specs=[pl.BlockSpec((tile_rows, lane), lambda i: (i, 0))],
            out_specs=pl.BlockSpec((tile_rows, lane), lambda i: (i, 0)),
        ),
        # Identity: reuse the (donated) input HBM buffer for the output.
        input_output_aliases={0: 0},
        compiler_params=pltpu.CompilerParams(
            dimension_semantics=("parallel",),
            # Headroom for 4 x 8 MiB double buffers; within v7x's 64 MiB
            # physical VMEM and far below v5e/v6e's 128 MiB.
            vmem_limit_bytes=48 * 1024 * 1024,
        ),
    )

    def fn(x):
        x2d = x.reshape(rows, lane)       # free layout plumbing under jit
        return copy_call(x2d).reshape(shape)

    # donate_argnums=0 makes input_output_aliases effective: XLA will not
    # insert a defensive copy of x before the aliased pallas_call.
    return jax.jit(fn, donate_argnums=0)


def print_shape(x, text=""):
    """Faithful Pallas-side equivalent of PrintShape.forward.

    Prints the shape on the host and returns x with zero device work — the
    single highest-value optimization for a pure identity op.
    """
    # TODO(synk): under an outer jax.jit this Python print fires only at trace
    # time (PyTorch prints every forward); use jax.debug.print if per-call
    # printing is required, accepting the host-callback sync cost.
    print(text, tuple(x.shape))
    return x


def print_shape_kernel(x, text=""):
    """Same semantics, but routes the identity through a Pallas copy kernel
    (cached + jitted + donated) when the layout allows; otherwise returns x."""
    print(text, tuple(x.shape))
    fn = _build_identity_copy(tuple(x.shape), jnp.dtype(x.dtype).name)
    if fn is None:
        return x  # ragged / empty: zero device work is the optimum
    return fn(x)  # NOTE: donates x's buffer


if __name__ == "__main__":
    key = jax.random.PRNGKey(0)
    shape = (2, 4, 16, 16)  # small NCHW input consistent with a conv-net intermediate

    # Two identical-valued, independently-buffered copies (same key): one is
    # donated into the kernel path, the other is kept for verification.
    x = jax.random.normal(key, shape, dtype=jnp.float32)
    x_ref = jax.random.normal(key, shape, dtype=jnp.float32)

    # 1) Faithful module path: print + zero-work identity.
    y0 = print_shape(x, text="PrintShape:")
    assert y0 is x

    # 2) Explicit Pallas kernel path (donates x).
    y1 = jax.block_until_ready(print_shape_kernel(x, text="PrintShape:"))
    assert y1.shape == shape
    assert y1.dtype == jnp.float32
    assert bool(jnp.all(y1 == x_ref))

    # 3) Ragged fallback path: identity with zero device work.
    x_ragged = jax.random.normal(key, (3, 5, 7), dtype=jnp.float32)
    y_ragged = jax.block_until_ready(print_shape_kernel(x_ragged, text="PrintShape:"))
    assert y_ragged is x_ragged
    assert y_ragged.shape == (3, 5, 7)

    print("KERNEL_OK")
</pallas_src>

<mosaic_0001>
module attributes {stable_mosaic.version = 11 : i64} {
  func.func @_identity_kernel(%arg0: i32, %arg1: memref<16x128xf32, #tpu.memory_space<vmem>>, %arg2: memref<16x128xf32, #tpu.memory_space<vmem>>) attributes {dimension_semantics = [#tpu.dimension_semantics<parallel>], iteration_bounds = array<i64: 1>, scalar_prefetch = 0 : i64, scratch_operands = 0 : i64, tpu.core_type = #tpu.core_type<tc>, window_params = [{transform_indices = @transform_0, window_bounds = array<i64: 16, 128>}, {transform_indices = @transform_1, window_bounds = array<i64: 16, 128>}]} {
    %c0 = arith.constant 0 : index
    %c0_0 = arith.constant 0 : index
    %0 = vector.load %arg1[%c0, %c0_0] : memref<16x128xf32, #tpu.memory_space<vmem>>, vector<16x128xf32>
    %c0_1 = arith.constant 0 : index
    %c0_2 = arith.constant 0 : index
    %1 = vector.load %arg2[%c0_1, %c0_2] : memref<16x128xf32, #tpu.memory_space<vmem>>, vector<16x128xf32>
    tpu.vector_store %arg2[%c0_1, %c0_2], %0 {strides = array<i32>} : memref<16x128xf32, #tpu.memory_space<vmem>>, vector<16x128xf32>,
    return
  }
  func.func @transform_0(%arg0: i32) -> (i32, i32) {
    %c0_i32 = arith.constant 0 : i32
    %c0_i32_0 = arith.constant 0 : i32
    return %arg0, %c0_i32 : i32, i32
  }
  func.func @transform_1(%arg0: i32) -> (i32, i32) {
    %c0_i32 = arith.constant 0 : i32
    %c0_i32_0 = arith.constant 0 : i32
    return %arg0, %c0_i32 : i32, i32
  }
}

</mosaic_0001>

<llo_original>
// kernel: fn.1
$region0: #{fn.1}
  #allocation0 [shape = 'u32[]', space=smem, size = 0x4, offset = 0x4, fixed_abs, tag = 'smem constant byte address 0x4 - core index']
  #allocation1 [shape = 'u32[144,128]{1,0:T(1,128)}', space=vmem, size = 0x12000, scoped, tag = 'internal scratch']
  %s0 = inlined_call_operand.vmem [shape: f32[16,128], index: 0, kind: input, shape index: {}, may-alias: {0,1}]
  %s1 = inlined_call_operand.vmem [shape: f32[16,128], index: 1, kind: output, shape index: {}, may-alias: {0,1}]
  %s2 = sld [smem:[#allocation0]]
  $region14: #{fn.1} parent=0
    _
  %s4 = ssub.s32 1, %s2
  %s5 = scalar_select 0, %s4, %s2
  // Predicated region
  $region2: #{fn.1} parent=0 // pred_check
    _
  $region3: #{fn.1} parent=0 // pred_check_branch
    %7 = sbr.rel (0) target = $region5
  $region4: #{fn.1} parent=0 // pred_region
    _
  $region5: #{fn.1} parent=0 // pred_fallthru
    _
  %v8 = vld [vmem:[%s0] sm:$0xff]
  %v9 = vld [vmem:[%s0 + $0x8] sm:$0xff]
  %10 = vst [vmem:[%s1] sm:$0xff] %v8
  %11 = vst [vmem:[%s1 + $0x8] sm:$0xff] %v9
  // Predicated region
  $region6: #{fn.1} parent=0 // pred_check
    _
  $region7: #{fn.1} parent=0 // pred_check_branch
    %13 = sbr.rel (0) target = $region9
  $region8: #{fn.1} parent=0 // pred_region
    _
  $region9: #{fn.1} parent=0 // pred_fallthru
    _
  // Predicated region
  $region10: #{fn.1} parent=0 // pred_check
    _
  $region11: #{fn.1} parent=0 // pred_check_branch
    %15 = sbr.rel (0) target = $region13
  $region12: #{fn.1} parent=0 // pred_region
    _
  $region13: #{fn.1} parent=0 // pred_fallthru
    _

</llo_original>
